<compile_context>
chip_gen: v7x
topology: tpu7x:2x2x1
jax: 0.10.0
libtpu: 0.0.40
codegen_flags: <defaults>
</compile_context>

<pallas_src>
import jax
import jax.numpy as jnp
from jax import lax
from jax.experimental import pallas as pl
from jax.experimental.pallas import tpu as pltpu


def _feat_exemplar_avg_kernel(labels_ref, feat_ref, out_ref):
    # labels_ref: (Bb, N, K), feat_ref: (Bb, N, nFeat), out_ref: (Bb, K, nFeat)
    feats = feat_ref[...]                                # (Bb, N, nFeat)
    labels_raw = labels_ref[...]                         # (Bb, N, K), original dtype

    # Matmul operand cast is exact for 0/1 labels; counts are taken from the
    # original-precision labels below.
    labels = labels_raw.astype(feats.dtype)

    # weight_novel = bmm(labels^T, features): contract over N directly on the
    # MXU via a batched dot_general -- no explicit transpose.
    w = lax.dot_general(
        labels, feats,
        dimension_numbers=(((1,), (1,)), ((0,), (0,))),
        preferred_element_type=jnp.float32,
    )                                                    # (Bb, K, nFeat) f32

    # Per-class exemplar counts: sublane reduction over N on the original
    # (Bb, N, K) tile.  Exact divide (kernel is nowhere near EUP/VPU-bound),
    # so zero-count classes produce Inf exactly like the PyTorch reference.
    counts = jnp.sum(labels_raw.astype(jnp.float32), axis=1)   # (Bb, K)
    out_ref[...] = (w / counts[:, :, None]).astype(out_ref.dtype)


def _pick_batch_block(B, N, K, nFeat, dtype_bytes,
                      min_step_bytes=1 << 20, max_steps=8):
    """Default to a single grid step (Bb = B).  Only split the batch when each
    resulting step still carries >= min_step_bytes of input DMA, so that the
    split can actually pay for itself on a 2-TC chip (v7x); on v5e/v6e the
    grid is a serial loop and extra steps are pure overhead."""
    total_step_bytes = B * N * (K + nFeat) * dtype_bytes
    if total_step_bytes < 2 * min_step_bytes:
        return B                                   # G = 1
    best_bb = B
    for g in range(2, max_steps + 1):
        if B % g == 0 and (total_step_bytes // g) >= min_step_bytes:
            best_bb = B // g
    return best_bb


def feat_exemplar_avg(features_train, labels_train, batch_block=None):
    """features_train: [B, N, nFeat], labels_train: [B, N, K] -> [B, K, nFeat]"""
    B, N, nFeat = features_train.shape
    Bl, Nl, K = labels_train.shape
    assert (Bl, Nl) == (B, N)

    dtype_bytes = jnp.dtype(features_train.dtype).itemsize
    Bb = (_pick_batch_block(B, N, K, nFeat, dtype_bytes)
          if batch_block is None else batch_block)
    assert B % Bb == 0, (B, Bb)
    G = B // Bb

    cost = pl.CostEstimate(
        flops=2 * B * N * K * nFeat,
        transcendentals=0,
        bytes_accessed=(labels_train.size * jnp.dtype(labels_train.dtype).itemsize
                        + features_train.size * dtype_bytes
                        + B * K * nFeat * dtype_bytes),
    )

    return pl.pallas_call(
        _feat_exemplar_avg_kernel,
        out_shape=jax.ShapeDtypeStruct((B, K, nFeat), features_train.dtype),
        grid_spec=pltpu.PrefetchScalarGridSpec(
            num_scalar_prefetch=0,
            grid=(G,),
            # Last two block dims equal the full array dims, so the (8, 128)
            # block constraint always holds regardless of N / K / nFeat.
            in_specs=[
                pl.BlockSpec((Bb, N, K), lambda g: (g, 0, 0)),
                pl.BlockSpec((Bb, N, nFeat), lambda g: (g, 0, 0)),
            ],
            out_specs=pl.BlockSpec((Bb, K, nFeat), lambda g: (g, 0, 0)),
        ),
        compiler_params=pltpu.CompilerParams(
            dimension_semantics=("parallel",),
        ),
        cost_estimate=cost,
    )(labels_train, features_train)


if __name__ == "__main__":
    # Few-shot-episode sized shapes: B=8 episodes, N=8 support exemplars,
    # K=4 novel classes, nFeat=32.
    B, N, K, nFeat = 8, 8, 4, 32

    key = jax.random.PRNGKey(0)
    k_feat, k_lab = jax.random.split(key)

    features_train = jax.random.normal(k_feat, (B, N, nFeat), dtype=jnp.float32)
    # One-hot labels with every class getting at least one exemplar
    # (avoids divide-by-zero; a zero count would produce Inf exactly like the
    # PyTorch reference).
    class_ids = jnp.concatenate(
        [jnp.arange(K), jax.random.randint(k_lab, (N - K,), 0, K)]
    )
    labels_train = jnp.tile(
        jax.nn.one_hot(class_ids, K, dtype=jnp.float32)[None], (B, 1, 1)
    )

    out = feat_exemplar_avg(features_train, labels_train)
    out = jax.block_until_ready(out)

    # Pure-JAX reference of the exact PyTorch semantics.
    lt = jnp.swapaxes(labels_train, 1, 2)                       # [B, K, N]
    ref = jnp.matmul(lt, features_train) / jnp.sum(lt, axis=2, keepdims=True)
    assert out.shape == (B, K, nFeat)
    # Exact division in-kernel -> tight tolerance.
    assert jnp.allclose(out, ref, atol=1e-6, rtol=1e-6), float(
        jnp.max(jnp.abs(out - ref))
    )

    print("KERNEL_OK")
</pallas_src>

<mosaic_0001>
module attributes {stable_mosaic.version = 11 : i64} {
  func.func @_feat_exemplar_avg_kernel(%arg0: i32, %arg1: memref<8x8x4xf32, #tpu.memory_space<vmem>>, %arg2: memref<8x8x32xf32, #tpu.memory_space<vmem>>, %arg3: memref<8x4x32xf32, #tpu.memory_space<vmem>>) attributes {dimension_semantics = [#tpu.dimension_semantics<parallel>], iteration_bounds = array<i64: 1>, scalar_prefetch = 0 : i64, scratch_operands = 0 : i64, tpu.core_type = #tpu.core_type<tc>, window_params = [{transform_indices = @transform_0, window_bounds = array<i64: 8, 8, 4>}, {transform_indices = @transform_1, window_bounds = array<i64: 8, 8, 32>}, {transform_indices = @transform_2, window_bounds = array<i64: 8, 4, 32>}]} {
    %c0 = arith.constant 0 : index
    %c0_0 = arith.constant 0 : index
    %c0_1 = arith.constant 0 : index
    %0 = vector.load %arg2[%c0, %c0_0, %c0_1] : memref<8x8x32xf32, #tpu.memory_space<vmem>>, vector<8x8x32xf32>
    %c0_2 = arith.constant 0 : index
    %c0_3 = arith.constant 0 : index
    %c0_4 = arith.constant 0 : index
    %1 = vector.load %arg1[%c0_2, %c0_3, %c0_4] : memref<8x8x4xf32, #tpu.memory_space<vmem>>, vector<8x8x4xf32>
    %cst = arith.constant dense<0.000000e+00> : vector<8x4x32xf32>
    %2 = tpu.matmul %1, %0, %cst {dimension_numbers = #tpu.dot_dimension_numbers<[1], [1], [2], [2], [0, 0, 0, 2, 1, 2], [0], [0]>} : vector<8x8x4xf32>, vector<8x8x32xf32>, vector<8x4x32xf32> -> vector<8x4x32xf32>
    %cst_5 = arith.constant dense<0.000000e+00> : vector<8x4xf32>
    %3 = vector.multi_reduction <add>, %1, %cst_5 [1] : vector<8x8x4xf32> to vector<8x4xf32>
    %4 = vector.shape_cast %3 : vector<8x4xf32> to vector<8x4x1xf32>
    %5 = vector.broadcast %4 : vector<8x4x1xf32> to vector<8x4x32xf32>
    %6 = arith.divf %2, %5 : vector<8x4x32xf32>
    %c0_6 = arith.constant 0 : index
    %c0_7 = arith.constant 0 : index
    %c0_8 = arith.constant 0 : index
    %7 = vector.load %arg3[%c0_6, %c0_7, %c0_8] : memref<8x4x32xf32, #tpu.memory_space<vmem>>, vector<8x4x32xf32>
    tpu.vector_store %arg3[%c0_6, %c0_7, %c0_8], %6 {strides = array<i32>} : memref<8x4x32xf32, #tpu.memory_space<vmem>>, vector<8x4x32xf32>,
    return
  }
  func.func @transform_0(%arg0: i32) -> (i32, i32, i32) {
    %c0_i32 = arith.constant 0 : i32
    %c0_i32_0 = arith.constant 0 : i32
    %c0_i32_1 = arith.constant 0 : i32
    return %arg0, %c0_i32, %c0_i32_0 : i32, i32, i32
  }
  func.func @transform_1(%arg0: i32) -> (i32, i32, i32) {
    %c0_i32 = arith.constant 0 : i32
    %c0_i32_0 = arith.constant 0 : i32
    %c0_i32_1 = arith.constant 0 : i32
    return %arg0, %c0_i32, %c0_i32_0 : i32, i32, i32
  }
  func.func @transform_2(%arg0: i32) -> (i32, i32, i32) {
    %c0_i32 = arith.constant 0 : i32
    %c0_i32_0 = arith.constant 0 : i32
    %c0_i32_1 = arith.constant 0 : i32
    return %arg0, %c0_i32, %c0_i32_0 : i32, i32, i32
  }
}

</mosaic_0001>

<llo_original>
// kernel: tpu_custom_call.1
$region0: #{tpu_custom_call.1}
  #allocation0 [shape = 'u32[]', space=smem, size = 0x4, offset = 0x4, fixed_abs, tag = 'smem constant byte address 0x4 - core index']
  #allocation1 [shape = 'u32[144,128]{1,0:T(1,128)}', space=vmem, size = 0x12000, scoped, tag = 'internal scratch']
  %s0 = inlined_call_operand.vmem [shape: f32[8,8,4], index: 0, kind: input, shape index: {}]
  %s1 = inlined_call_operand.vmem [shape: f32[8,8,32], index: 1, kind: input, shape index: {}]
  %s2 = inlined_call_operand.hbm [shape: f32[8,4,32], index: 2, kind: output, shape index: {}]
  %s3 = sld [smem:[#allocation0]]
  $region18: #{tpu_custom_call.1} parent=0
    _
  %s5 = ssub.s32 1, %s3
  %s6 = scalar_select 0, %s5, %s3
  $region1: #{tpu_custom_call.1} parent=0
    #allocation2 [shape = 'u8[16384]{0}', space=vmem, size = 0x4000, scoped, tag = 'output window, operand 0, single buffered']
    #allocation3 [shape = 's32[1]{0}', space=sflag, size = 0x4, scoped, tag = 'scoped memory for tpu_custom_call.1']
    %7 = vsyncpa [#allocation3], 0
    // Predicated region
    $region2: #{tpu_custom_call.1} parent=1 // pred_check
      _
    $region3: #{tpu_custom_call.1} parent=1 // pred_check_branch
      %9 = sbr.rel (0) target = $region5
    $region4: #{tpu_custom_call.1} parent=1 // pred_region
      _
    $region5: #{tpu_custom_call.1} parent=1 // pred_fallthru
      _
    // Predicated region
    $region6: #{tpu_custom_call.1} parent=1 // pred_check
      _
    $region7: #{tpu_custom_call.1} parent=1 // pred_check_branch
      %11 = sbr.rel (0) target = $region9
    $region8: #{tpu_custom_call.1} parent=1 // pred_region
      _
    $region9: #{tpu_custom_call.1} parent=1 // pred_fallthru
      _
    %v12 = vld [vmem:[%s1] sm:$0xff]
    %v13 = vld [vmem:[%s1 + $0x8] sm:$0xff]
    %v14 = vld [vmem:[%s1 + $0x10] sm:$0xff]
    %v15 = vld [vmem:[%s1 + $0x18] sm:$0xff]
    %v16 = vld [vmem:[%s1 + $0x20] sm:$0xff]
    %v17 = vld [vmem:[%s1 + $0x28] sm:$0xff]
    %v18 = vld [vmem:[%s1 + $0x30] sm:$0xff]
    %v19 = vld [vmem:[%s1 + $0x38] sm:$0xff]
    %v20 = vld [vmem:[%s0] sm:$0xff]
    %v21 = vld [vmem:[%s0 + $0x8] sm:$0xff]
    %v22 = vld [vmem:[%s0 + $0x10] sm:$0xff]
    %v23 = vld [vmem:[%s0 + $0x18] sm:$0xff]
    %v24 = vld [vmem:[%s0 + $0x20] sm:$0xff]
    %v25 = vld [vmem:[%s0 + $0x28] sm:$0xff]
    %v26 = vld [vmem:[%s0 + $0x30] sm:$0xff]
    %v27 = vld [vmem:[%s0 + $0x38] sm:$0xff]
    %28 = vxpose.xlu0.b32.start [1/16] %v20, 128
    %29 = vxpose.xlu0.b32.cont [2/16] 0.0, 128
    %30 = vxpose.xlu0.b32.cont [3/16] 0.0, 128
    %31 = vxpose.xlu0.b32.cont [4/16] 0.0, 128
    %32 = vxpose.xlu0.b32.cont [5/16] 0.0, 128
    %33 = vxpose.xlu0.b32.cont [6/16] 0.0, 128
    %34 = vxpose.xlu0.b32.cont [7/16] 0.0, 128
    %35 = vxpose.xlu0.b32.cont [8/16] 0.0, 128
    %36 = vxpose.xlu0.b32.cont [9/16] 0.0, 128
    %37 = vxpose.xlu0.b32.cont [10/16] 0.0, 128
    %38 = vxpose.xlu0.b32.cont [11/16] 0.0, 128
    %39 = vxpose.xlu0.b32.cont [12/16] 0.0, 128
    %40 = vxpose.xlu0.b32.cont [13/16] 0.0, 128
    %41 = vxpose.xlu0.b32.cont [14/16] 0.0, 128
    %42 = vxpose.xlu0.b32.cont [15/16] 0.0, 128
    %43 = vxpose.xlu0.b32.end [16/16] 0.0, 128
    %v44 = vpop.trf.xlu0
    %v45 = vpop.trf.xlu0
    %v46 = vpop.trf.xlu0
    %v47 = vpop.trf.xlu0
    %v48 = vpop.trf.xlu0
    %v49 = vpop.trf.xlu0
    %v50 = vpop.trf.xlu0
    %v51 = vpop.trf.xlu0
    %v52 = vpop.trf.xlu0
    %v53 = vpop.trf.xlu0
    %v54 = vpop.trf.xlu0
    %v55 = vpop.trf.xlu0
    %v56 = vpop.trf.xlu0
    %v57 = vpop.trf.xlu0
    %v58 = vpop.trf.xlu0
    %v59 = vpop.trf.xlu0
    %vm60 = vcmask 64512
    %v62 = vsel %vm60, %v44, 0
    %64 = vmatprep.subr.mxu0 0.0
    %65 = vmatpush1.msra.mxu0 %v12
    %66 = vmatprep.subr.mxu0 0.0
    %67 = vmatpush1.msra.mxu0 0.0
    %68 = vmatprep.subr.mxu0 0.0
    %69 = vmatpush1.msra.mxu0 0.0
    %70 = vmatprep.subr.mxu0 0.0
    %71 = vmatpush1.msra.mxu0 0.0
    %72 = vmatprep.subr.mxu0 0.0
    %73 = vmatpush1.msra.mxu0 0.0
    %74 = vmatprep.subr.mxu0 0.0
    %75 = vmatpush1.msra.mxu0 0.0
    %76 = vmatprep.subr.mxu0 0.0
    %77 = vmatpush1.msra.mxu0 0.0
    %78 = vmatprep.subr.mxu0 0.0
    %79 = vmatpush1.msra.mxu0 0.0
    %80 = vmatprep.subr.mxu0 0.0
    %81 = vmatpush1.msra.mxu0 0.0
    %82 = vmatprep.subr.mxu0 0.0
    %83 = vmatpush1.msra.mxu0 0.0
    %84 = vmatprep.subr.mxu0 0.0
    %85 = vmatpush1.msra.mxu0 0.0
    %86 = vmatprep.subr.mxu0 0.0
    %87 = vmatpush1.msra.mxu0 0.0
    %88 = vmatprep.subr.mxu0 0.0
    %89 = vmatpush1.msra.mxu0 0.0
    %90 = vmatprep.subr.mxu0 0.0
    %91 = vmatpush1.msra.mxu0 0.0
    %92 = vmatprep.subr.mxu0 0.0
    %93 = vmatpush1.msra.mxu0 0.0
    %94 = vmatprep.subr.mxu0 0.0
    %95 = vmatpush1.msra.mxu0 0.0
    %96 = vmatprep.subr.mxu0 0.0
    %97 = vmatpush1.msra.mxu0 0.0
    %98 = vmatprep.subr.mxu0 0.0
    %99 = vmatpush1.msra.mxu0 0.0
    %100 = vmatprep.subr.mxu0 0.0
    %101 = vmatpush1.msra.mxu0 0.0
    %102 = vmatprep.subr.mxu0 0.0
    %103 = vmatpush1.msra.mxu0 0.0
    %104 = vmatprep.subr.mxu0 0.0
    %105 = vmatpush1.msra.mxu0 0.0
    %106 = vmatprep.subr.mxu0 0.0
    %107 = vmatpush1.msra.mxu0 0.0
    %108 = vmatprep.subr.mxu0 0.0
    %109 = vmatpush1.msra.mxu0 0.0
    %110 = vmatprep.subr.mxu0 0.0
    %111 = vmatpush1.msra.mxu0 0.0
    %112 = vmatprep.subr.mxu0 0.0
    %113 = vmatpush1.msra.mxu0 0.0
    %114 = vmatprep.subr.mxu0 0.0
    %115 = vmatpush1.msra.mxu0 0.0
    %116 = vmatprep.subr.mxu0 0.0
    %117 = vmatpush1.msra.mxu0 0.0
    %118 = vmatprep.subr.mxu0 0.0
    %119 = vmatpush1.msra.mxu0 0.0
    %120 = vmatprep.subr.mxu0 0.0
    %121 = vmatpush1.msra.mxu0 0.0
    %122 = vmatprep.subr.mxu0 0.0
    %123 = vmatpush1.msra.mxu0 0.0
    %124 = vmatprep.subr.mxu0 0.0
    %125 = vmatpush1.msra.mxu0 0.0
    %126 = vmatprep.subr.mxu0 0.0
    %127 = vmatpush1.msra.mxu0 0.0
    %128 = vmatprep.mubr.f32.mxu0 0.0
    %129 = vmatmul.mubr.f32.gmra.mrb[0].mxu0 %v62
    %v130 = vpop.f32.mrb[0].mxu0
    %v131 = vadd.f32 0.0, %v130
    %v132 = vpop.f32.mrb[0].mxu0
    %133 = vdwg.mxu0
    %134 = vxpose.xlu0.b32.start [1/16] %v21, 128
    %135 = vxpose.xlu0.b32.cont [2/16] 0.0, 128
    %136 = vxpose.xlu0.b32.cont [3/16] 0.0, 128
    %137 = vxpose.xlu0.b32.cont [4/16] 0.0, 128
    %138 = vxpose.xlu0.b32.cont [5/16] 0.0, 128
    %139 = vxpose.xlu0.b32.cont [6/16] 0.0, 128
    %140 = vxpose.xlu0.b32.cont [7/16] 0.0, 128
    %141 = vxpose.xlu0.b32.cont [8/16] 0.0, 128
    %142 = vxpose.xlu0.b32.cont [9/16] 0.0, 128
    %143 = vxpose.xlu0.b32.cont [10/16] 0.0, 128
    %144 = vxpose.xlu0.b32.cont [11/16] 0.0, 128
    %145 = vxpose.xlu0.b32.cont [12/16] 0.0, 128
    %146 = vxpose.xlu0.b32.cont [13/16] 0.0, 128
    %147 = vxpose.xlu0.b32.cont [14/16] 0.0, 128
    %148 = vxpose.xlu0.b32.cont [15/16] 0.0, 128
    %149 = vxpose.xlu0.b32.end [16/16] 0.0, 128
    %v150 = vpop.trf.xlu0
    %v151 = vpop.trf.xlu0
    %v152 = vpop.trf.xlu0
    %v153 = vpop.trf.xlu0
    %v154 = vpop.trf.xlu0
    %v155 = vpop.trf.xlu0
    %v156 = vpop.trf.xlu0
    %v157 = vpop.trf.xlu0
    %v158 = vpop.trf.xlu0
    %v159 = vpop.trf.xlu0
    %v160 = vpop.trf.xlu0
    %v161 = vpop.trf.xlu0
    %v162 = vpop.trf.xlu0
    %v163 = vpop.trf.xlu0
    %v164 = vpop.trf.xlu0
    %v165 = vpop.trf.xlu0
    %v167 = vsel %vm60, %v150, 0
    %169 = vmatprep.subr.mxu0 0.0
    %170 = vmatpush1.msra.mxu0 %v13
    %171 = vmatprep.subr.mxu0 0.0
    %172 = vmatpush1.msra.mxu0 0.0
    %173 = vmatprep.subr.mxu0 0.0
    %174 = vmatpush1.msra.mxu0 0.0
    %175 = vmatprep.subr.mxu0 0.0
    %176 = vmatpush1.msra.mxu0 0.0
    %177 = vmatprep.subr.mxu0 0.0
    %178 = vmatpush1.msra.mxu0 0.0
    %179 = vmatprep.subr.mxu0 0.0
    %180 = vmatpush1.msra.mxu0 0.0
    %181 = vmatprep.subr.mxu0 0.0
    %182 = vmatpush1.msra.mxu0 0.0
    %183 = vmatprep.subr.mxu0 0.0
    %184 = vmatpush1.msra.mxu0 0.0
    %185 = vmatprep.subr.mxu0 0.0
    %186 = vmatpush1.msra.mxu0 0.0
    %187 = vmatprep.subr.mxu0 0.0
    %188 = vmatpush1.msra.mxu0 0.0
    %189 = vmatprep.subr.mxu0 0.0
    %190 = vmatpush1.msra.mxu0 0.0
    %191 = vmatprep.subr.mxu0 0.0
    %192 = vmatpush1.msra.mxu0 0.0
    %193 = vmatprep.subr.mxu0 0.0
    %194 = vmatpush1.msra.mxu0 0.0
    %195 = vmatprep.subr.mxu0 0.0
    %196 = vmatpush1.msra.mxu0 0.0
    %197 = vmatprep.subr.mxu0 0.0
    %198 = vmatpush1.msra.mxu0 0.0
    %199 = vmatprep.subr.mxu0 0.0
    %200 = vmatpush1.msra.mxu0 0.0
    %201 = vmatprep.subr.mxu0 0.0
    %202 = vmatpush1.msra.mxu0 0.0
    %203 = vmatprep.subr.mxu0 0.0
    %204 = vmatpush1.msra.mxu0 0.0
    %205 = vmatprep.subr.mxu0 0.0
    %206 = vmatpush1.msra.mxu0 0.0
    %207 = vmatprep.subr.mxu0 0.0
    %208 = vmatpush1.msra.mxu0 0.0
    %209 = vmatprep.subr.mxu0 0.0
    %210 = vmatpush1.msra.mxu0 0.0
    %211 = vmatprep.subr.mxu0 0.0
    %212 = vmatpush1.msra.mxu0 0.0
    %213 = vmatprep.subr.mxu0 0.0
    %214 = vmatpush1.msra.mxu0 0.0
    %215 = vmatprep.subr.mxu0 0.0
    %216 = vmatpush1.msra.mxu0 0.0
    %217 = vmatprep.subr.mxu0 0.0
    %218 = vmatpush1.msra.mxu0 0.0
    %219 = vmatprep.subr.mxu0 0.0
    %220 = vmatpush1.msra.mxu0 0.0
    %221 = vmatprep.subr.mxu0 0.0
    %222 = vmatpush1.msra.mxu0 0.0
    %223 = vmatprep.subr.mxu0 0.0
    %224 = vmatpush1.msra.mxu0 0.0
    %225 = vmatprep.subr.mxu0 0.0
    %226 = vmatpush1.msra.mxu0 0.0
    %227 = vmatprep.subr.mxu0 0.0
    %228 = vmatpush1.msra.mxu0 0.0
    %229 = vmatprep.subr.mxu0 0.0
    %230 = vmatpush1.msra.mxu0 0.0
    %231 = vmatprep.subr.mxu0 0.0
    %232 = vmatpush1.msra.mxu0 0.0
    %233 = vmatprep.mubr.f32.mxu0 0.0
    %234 = vmatmul.mubr.f32.gmra.mrb[0].mxu0 %v167
    %v235 = vpop.f32.mrb[0].mxu0
    %v236 = vadd.f32 0.0, %v235
    %v237 = vpop.f32.mrb[0].mxu0
    %238 = vdwg.mxu0
    %239 = vxpose.xlu0.b32.start [1/16] %v22, 128
    %240 = vxpose.xlu0.b32.cont [2/16] 0.0, 128
    %241 = vxpose.xlu0.b32.cont [3/16] 0.0, 128
    %242 = vxpose.xlu0.b32.cont [4/16] 0.0, 128
    %243 = vxpose.xlu0.b32.cont [5/16] 0.0, 128
    %244 = vxpose.xlu0.b32.cont [6/16] 0.0, 128
    %245 = vxpose.xlu0.b32.cont [7/16] 0.0, 128
    %246 = vxpose.xlu0.b32.cont [8/16] 0.0, 128
    %247 = vxpose.xlu0.b32.cont [9/16] 0.0, 128
    %248 = vxpose.xlu0.b32.cont [10/16] 0.0, 128
    %249 = vxpose.xlu0.b32.cont [11/16] 0.0, 128
    %250 = vxpose.xlu0.b32.cont [12/16] 0.0, 128
    %251 = vxpose.xlu0.b32.cont [13/16] 0.0, 128
    %252 = vxpose.xlu0.b32.cont [14/16] 0.0, 128
    %253 = vxpose.xlu0.b32.cont [15/16] 0.0, 128
    %254 = vxpose.xlu0.b32.end [16/16] 0.0, 128
    %v255 = vpop.trf.xlu0
    %v256 = vpop.trf.xlu0
    %v257 = vpop.trf.xlu0
    %v258 = vpop.trf.xlu0
    %v259 = vpop.trf.xlu0
    %v260 = vpop.trf.xlu0
    %v261 = vpop.trf.xlu0
    %v262 = vpop.trf.xlu0
    %v263 = vpop.trf.xlu0
    %v264 = vpop.trf.xlu0
    %v265 = vpop.trf.xlu0
    %v266 = vpop.trf.xlu0
    %v267 = vpop.trf.xlu0
    %v268 = vpop.trf.xlu0
    %v269 = vpop.trf.xlu0
    %v270 = vpop.trf.xlu0
    %v272 = vsel %vm60, %v255, 0
    %274 = vmatprep.subr.mxu0 0.0
    %275 = vmatpush1.msra.mxu0 %v14
    %276 = vmatprep.subr.mxu0 0.0
    %277 = vmatpush1.msra.mxu0 0.0
    %278 = vmatprep.subr.mxu0 0.0
    %279 = vmatpush1.msra.mxu0 0.0
    %280 = vmatprep.subr.mxu0 0.0
    %281 = vmatpush1.msra.mxu0 0.0
    %282 = vmatprep.subr.mxu0 0.0
    %283 = vmatpush1.msra.mxu0 0.0
    %284 = vmatprep.subr.mxu0 0.0
    %285 = vmatpush1.msra.mxu0 0.0
    %286 = vmatprep.subr.mxu0 0.0
    %287 = vmatpush1.msra.mxu0 0.0
    %288 = vmatprep.subr.mxu0 0.0
    %289 = vmatpush1.msra.mxu0 0.0
    %290 = vmatprep.subr.mxu0 0.0
    %291 = vmatpush1.msra.mxu0 0.0
    %292 = vmatprep.subr.mxu0 0.0
    %293 = vmatpush1.msra.mxu0 0.0
    %294 = vmatprep.subr.mxu0 0.0
    %295 = vmatpush1.msra.mxu0 0.0
    %296 = vmatprep.subr.mxu0 0.0
    %297 = vmatpush1.msra.mxu0 0.0
    %298 = vmatprep.subr.mxu0 0.0
    %299 = vmatpush1.msra.mxu0 0.0
    %300 = vmatprep.subr.mxu0 0.0
    %301 = vmatpush1.msra.mxu0 0.0
    %302 = vmatprep.subr.mxu0 0.0
    %303 = vmatpush1.msra.mxu0 0.0
    %304 = vmatprep.subr.mxu0 0.0
    %305 = vmatpush1.msra.mxu0 0.0
    %306 = vmatprep.subr.mxu0 0.0
    %307 = vmatpush1.msra.mxu0 0.0
    %308 = vmatprep.subr.mxu0 0.0
    %309 = vmatpush1.msra.mxu0 0.0
    %310 = vmatprep.subr.mxu0 0.0
    %311 = vmatpush1.msra.mxu0 0.0
    %312 = vmatprep.subr.mxu0 0.0
    %313 = vmatpush1.msra.mxu0 0.0
    %314 = vmatprep.subr.mxu0 0.0
    %315 = vmatpush1.msra.mxu0 0.0
    %316 = vmatprep.subr.mxu0 0.0
    %317 = vmatpush1.msra.mxu0 0.0
    %318 = vmatprep.subr.mxu0 0.0
    %319 = vmatpush1.msra.mxu0 0.0
    %320 = vmatprep.subr.mxu0 0.0
    %321 = vmatpush1.msra.mxu0 0.0
    %322 = vmatprep.subr.mxu0 0.0
    %323 = vmatpush1.msra.mxu0 0.0
    %324 = vmatprep.subr.mxu0 0.0
    %325 = vmatpush1.msra.mxu0 0.0
    %326 = vmatprep.subr.mxu0 0.0
    %327 = vmatpush1.msra.mxu0 0.0
    %328 = vmatprep.subr.mxu0 0.0
    %329 = vmatpush1.msra.mxu0 0.0
    %330 = vmatprep.subr.mxu0 0.0
    %331 = vmatpush1.msra.mxu0 0.0
    %332 = vmatprep.subr.mxu0 0.0
    %333 = vmatpush1.msra.mxu0 0.0
    %334 = vmatprep.subr.mxu0 0.0
    %335 = vmatpush1.msra.mxu0 0.0
    %336 = vmatprep.subr.mxu0 0.0
    %337 = vmatpush1.msra.mxu0 0.0
    %338 = vmatprep.mubr.f32.mxu0 0.0
    %339 = vmatmul.mubr.f32.gmra.mrb[0].mxu0 %v272
    %v340 = vpop.f32.mrb[0].mxu0
    %v341 = vadd.f32 0.0, %v340
    %v342 = vpop.f32.mrb[0].mxu0
    %343 = vdwg.mxu0
    %344 = vxpose.xlu0.b32.start [1/16] %v23, 128
    %345 = vxpose.xlu0.b32.cont [2/16] 0.0, 128
    %346 = vxpose.xlu0.b32.cont [3/16] 0.0, 128
    %347 = vxpose.xlu0.b32.cont [4/16] 0.0, 128
    %348 = vxpose.xlu0.b32.cont [5/16] 0.0, 128
    %349 = vxpose.xlu0.b32.cont [6/16] 0.0, 128
    %350 = vxpose.xlu0.b32.cont [7/16] 0.0, 128
    %351 = vxpose.xlu0.b32.cont [8/16] 0.0, 128
    %352 = vxpose.xlu0.b32.cont [9/16] 0.0, 128
    %353 = vxpose.xlu0.b32.cont [10/16] 0.0, 128
    %354 = vxpose.xlu0.b32.cont [11/16] 0.0, 128
    %355 = vxpose.xlu0.b32.cont [12/16] 0.0, 128
    %356 = vxpose.xlu0.b32.cont [13/16] 0.0, 128
    %357 = vxpose.xlu0.b32.cont [14/16] 0.0, 128
    %358 = vxpose.xlu0.b32.cont [15/16] 0.0, 128
    %359 = vxpose.xlu0.b32.end [16/16] 0.0, 128
    %v360 = vpop.trf.xlu0
    %v361 = vpop.trf.xlu0
    %v362 = vpop.trf.xlu0
    %v363 = vpop.trf.xlu0
    %v364 = vpop.trf.xlu0
    %v365 = vpop.trf.xlu0
    %v366 = vpop.trf.xlu0
    %v367 = vpop.trf.xlu0
    %v368 = vpop.trf.xlu0
    %v369 = vpop.trf.xlu0
    %v370 = vpop.trf.xlu0
    %v371 = vpop.trf.xlu0
    %v372 = vpop.trf.xlu0
    %v373 = vpop.trf.xlu0
    %v374 = vpop.trf.xlu0
    %v375 = vpop.trf.xlu0
    %v377 = vsel %vm60, %v360, 0
    %379 = vmatprep.subr.mxu0 0.0
    %380 = vmatpush1.msra.mxu0 %v15
    %381 = vmatprep.subr.mxu0 0.0
    %382 = vmatpush1.msra.mxu0 0.0
    %383 = vmatprep.subr.mxu0 0.0
    %384 = vmatpush1.msra.mxu0 0.0
    %385 = vmatprep.subr.mxu0 0.0
    %386 = vmatpush1.msra.mxu0 0.0
    %387 = vmatprep.subr.mxu0 0.0
    %388 = vmatpush1.msra.mxu0 0.0
    %389 = vmatprep.subr.mxu0 0.0
    %390 = vmatpush1.msra.mxu0 0.0
    %391 = vmatprep.subr.mxu0 0.0
    %392 = vmatpush1.msra.mxu0 0.0
    %393 = vmatprep.subr.mxu0 0.0
    %394 = vmatpush1.msra.mxu0 0.0
    %395 = vmatprep.subr.mxu0 0.0
    %396 = vmatpush1.msra.mxu0 0.0
    %397 = vmatprep.subr.mxu0 0.0
    %398 = vmatpush1.msra.mxu0 0.0
    %399 = vmatprep.subr.mxu0 0.0
    %400 = vmatpush1.msra.mxu0 0.0
    %401 = vmatprep.subr.mxu0 0.0
    %402 = vmatpush1.msra.mxu0 0.0
    %403 = vmatprep.subr.mxu0 0.0
    %404 = vmatpush1.msra.mxu0 0.0
    %405 = vmatprep.subr.mxu0 0.0
    %406 = vmatpush1.msra.mxu0 0.0
    %407 = vmatprep.subr.mxu0 0.0
    %408 = vmatpush1.msra.mxu0 0.0
    %409 = vmatprep.subr.mxu0 0.0
    %410 = vmatpush1.msra.mxu0 0.0
    %411 = vmatprep.subr.mxu0 0.0
    %412 = vmatpush1.msra.mxu0 0.0
    %413 = vmatprep.subr.mxu0 0.0
    %414 = vmatpush1.msra.mxu0 0.0
    %415 = vmatprep.subr.mxu0 0.0
    %416 = vmatpush1.msra.mxu0 0.0
    %417 = vmatprep.subr.mxu0 0.0
    %418 = vmatpush1.msra.mxu0 0.0
    %419 = vmatprep.subr.mxu0 0.0
    %420 = vmatpush1.msra.mxu0 0.0
    %421 = vmatprep.subr.mxu0 0.0
    %422 = vmatpush1.msra.mxu0 0.0
    %423 = vmatprep.subr.mxu0 0.0
    %424 = vmatpush1.msra.mxu0 0.0
    %425 = vmatprep.subr.mxu0 0.0
    %426 = vmatpush1.msra.mxu0 0.0
    %427 = vmatprep.subr.mxu0 0.0
    %428 = vmatpush1.msra.mxu0 0.0
    %429 = vmatprep.subr.mxu0 0.0
    %430 = vmatpush1.msra.mxu0 0.0
    %431 = vmatprep.subr.mxu0 0.0
    %432 = vmatpush1.msra.mxu0 0.0
    %433 = vmatprep.subr.mxu0 0.0
    %434 = vmatpush1.msra.mxu0 0.0
    %435 = vmatprep.subr.mxu0 0.0
    %436 = vmatpush1.msra.mxu0 0.0
    %437 = vmatprep.subr.mxu0 0.0
    %438 = vmatpush1.msra.mxu0 0.0
    %439 = vmatprep.subr.mxu0 0.0
    %440 = vmatpush1.msra.mxu0 0.0
    %441 = vmatprep.subr.mxu0 0.0
    %442 = vmatpush1.msra.mxu0 0.0
    %443 = vmatprep.mubr.f32.mxu0 0.0
    %444 = vmatmul.mubr.f32.gmra.mrb[0].mxu0 %v377
    %v445 = vpop.f32.mrb[0].mxu0
    %v446 = vadd.f32 0.0, %v445
    %v447 = vpop.f32.mrb[0].mxu0
    %448 = vdwg.mxu0
    %449 = vxpose.xlu0.b32.start [1/16] %v24, 128
    %450 = vxpose.xlu0.b32.cont [2/16] 0.0, 128
    %451 = vxpose.xlu0.b32.cont [3/16] 0.0, 128
    %452 = vxpose.xlu0.b32.cont [4/16] 0.0, 128
    %453 = vxpose.xlu0.b32.cont [5/16] 0.0, 128
    %454 = vxpose.xlu0.b32.cont [6/16] 0.0, 128
    %455 = vxpose.xlu0.b32.cont [7/16] 0.0, 128
    %456 = vxpose.xlu0.b32.cont [8/16] 0.0, 128
    %457 = vxpose.xlu0.b32.cont [9/16] 0.0, 128
    %458 = vxpose.xlu0.b32.cont [10/16] 0.0, 128
    %459 = vxpose.xlu0.b32.cont [11/16] 0.0, 128
    %460 = vxpose.xlu0.b32.cont [12/16] 0.0, 128
    %461 = vxpose.xlu0.b32.cont [13/16] 0.0, 128
    %462 = vxpose.xlu0.b32.cont [14/16] 0.0, 128
    %463 = vxpose.xlu0.b32.cont [15/16] 0.0, 128
    %464 = vxpose.xlu0.b32.end [16/16] 0.0, 128
    %v465 = vpop.trf.xlu0
    %v466 = vpop.trf.xlu0
    %v467 = vpop.trf.xlu0
    %v468 = vpop.trf.xlu0
    %v469 = vpop.trf.xlu0
    %v470 = vpop.trf.xlu0
    %v471 = vpop.trf.xlu0
    %v472 = vpop.trf.xlu0
    %v473 = vpop.trf.xlu0
    %v474 = vpop.trf.xlu0
    %v475 = vpop.trf.xlu0
    %v476 = vpop.trf.xlu0
    %v477 = vpop.trf.xlu0
    %v478 = vpop.trf.xlu0
    %v479 = vpop.trf.xlu0
    %v480 = vpop.trf.xlu0
    %v482 = vsel %vm60, %v465, 0
    %484 = vmatprep.subr.mxu0 0.0
    %485 = vmatpush1.msra.mxu0 %v16
    %486 = vmatprep.subr.mxu0 0.0
    %487 = vmatpush1.msra.mxu0 0.0
    %488 = vmatprep.subr.mxu0 0.0
    %489 = vmatpush1.msra.mxu0 0.0
    %490 = vmatprep.subr.mxu0 0.0
    %491 = vmatpush1.msra.mxu0 0.0
    %492 = vmatprep.subr.mxu0 0.0
    %493 = vmatpush1.msra.mxu0 0.0
    %494 = vmatprep.subr.mxu0 0.0
    %495 = vmatpush1.msra.mxu0 0.0
    %496 = vmatprep.subr.mxu0 0.0
    %497 = vmatpush1.msra.mxu0 0.0
    %498 = vmatprep.subr.mxu0 0.0
    %499 = vmatpush1.msra.mxu0 0.0
    %500 = vmatprep.subr.mxu0 0.0
    %501 = vmatpush1.msra.mxu0 0.0
    %502 = vmatprep.subr.mxu0 0.0
    %503 = vmatpush1.msra.mxu0 0.0
    %504 = vmatprep.subr.mxu0 0.0
    %505 = vmatpush1.msra.mxu0 0.0
    %506 = vmatprep.subr.mxu0 0.0
    %507 = vmatpush1.msra.mxu0 0.0
    %508 = vmatprep.subr.mxu0 0.0
    %509 = vmatpush1.msra.mxu0 0.0
    %510 = vmatprep.subr.mxu0 0.0
    %511 = vmatpush1.msra.mxu0 0.0
    %512 = vmatprep.subr.mxu0 0.0
    %513 = vmatpush1.msra.mxu0 0.0
    %514 = vmatprep.subr.mxu0 0.0
    %515 = vmatpush1.msra.mxu0 0.0
    %516 = vmatprep.subr.mxu0 0.0
    %517 = vmatpush1.msra.mxu0 0.0
    %518 = vmatprep.subr.mxu0 0.0
    %519 = vmatpush1.msra.mxu0 0.0
    %520 = vmatprep.subr.mxu0 0.0
    %521 = vmatpush1.msra.mxu0 0.0
    %522 = vmatprep.subr.mxu0 0.0
    %523 = vmatpush1.msra.mxu0 0.0
    %524 = vmatprep.subr.mxu0 0.0
    %525 = vmatpush1.msra.mxu0 0.0
    %526 = vmatprep.subr.mxu0 0.0
    %527 = vmatpush1.msra.mxu0 0.0
    %528 = vmatprep.subr.mxu0 0.0
    %529 = vmatpush1.msra.mxu0 0.0
    %530 = vmatprep.subr.mxu0 0.0
    %531 = vmatpush1.msra.mxu0 0.0
    %532 = vmatprep.subr.mxu0 0.0
    %533 = vmatpush1.msra.mxu0 0.0
    %534 = vmatprep.subr.mxu0 0.0
    %535 = vmatpush1.msra.mxu0 0.0
    %536 = vmatprep.subr.mxu0 0.0
    %537 = vmatpush1.msra.mxu0 0.0
    %538 = vmatprep.subr.mxu0 0.0
    %539 = vmatpush1.msra.mxu0 0.0
    %540 = vmatprep.subr.mxu0 0.0
    %541 = vmatpush1.msra.mxu0 0.0
    %542 = vmatprep.subr.mxu0 0.0
    %543 = vmatpush1.msra.mxu0 0.0
    %544 = vmatprep.subr.mxu0 0.0
    %545 = vmatpush1.msra.mxu0 0.0
    %546 = vmatprep.subr.mxu0 0.0
    %547 = vmatpush1.msra.mxu0 0.0
    %548 = vmatprep.mubr.f32.mxu0 0.0
    %549 = vmatmul.mubr.f32.gmra.mrb[0].mxu0 %v482
    %v550 = vpop.f32.mrb[0].mxu0
    %v551 = vadd.f32 0.0, %v550
    %v552 = vpop.f32.mrb[0].mxu0
    %553 = vdwg.mxu0
    %554 = vxpose.xlu0.b32.start [1/16] %v25, 128
    %555 = vxpose.xlu0.b32.cont [2/16] 0.0, 128
    %556 = vxpose.xlu0.b32.cont [3/16] 0.0, 128
    %557 = vxpose.xlu0.b32.cont [4/16] 0.0, 128
    %558 = vxpose.xlu0.b32.cont [5/16] 0.0, 128
    %559 = vxpose.xlu0.b32.cont [6/16] 0.0, 128
    %560 = vxpose.xlu0.b32.cont [7/16] 0.0, 128
    %561 = vxpose.xlu0.b32.cont [8/16] 0.0, 128
    %562 = vxpose.xlu0.b32.cont [9/16] 0.0, 128
    %563 = vxpose.xlu0.b32.cont [10/16] 0.0, 128
    %564 = vxpose.xlu0.b32.cont [11/16] 0.0, 128
    %565 = vxpose.xlu0.b32.cont [12/16] 0.0, 128
    %566 = vxpose.xlu0.b32.cont [13/16] 0.0, 128
    %567 = vxpose.xlu0.b32.cont [14/16] 0.0, 128
    %568 = vxpose.xlu0.b32.cont [15/16] 0.0, 128
    %569 = vxpose.xlu0.b32.end [16/16] 0.0, 128
    %v570 = vpop.trf.xlu0
    %v571 = vpop.trf.xlu0
    %v572 = vpop.trf.xlu0
    %v573 = vpop.trf.xlu0
    %v574 = vpop.trf.xlu0
    %v575 = vpop.trf.xlu0
    %v576 = vpop.trf.xlu0
    %v577 = vpop.trf.xlu0
    %v578 = vpop.trf.xlu0
    %v579 = vpop.trf.xlu0
    %v580 = vpop.trf.xlu0
    %v581 = vpop.trf.xlu0
    %v582 = vpop.trf.xlu0
    %v583 = vpop.trf.xlu0
    %v584 = vpop.trf.xlu0
    %v585 = vpop.trf.xlu0
    %v587 = vsel %vm60, %v570, 0
    %589 = vmatprep.subr.mxu0 0.0
    %590 = vmatpush1.msra.mxu0 %v17
    %591 = vmatprep.subr.mxu0 0.0
    %592 = vmatpush1.msra.mxu0 0.0
    %593 = vmatprep.subr.mxu0 0.0
    %594 = vmatpush1.msra.mxu0 0.0
    %595 = vmatprep.subr.mxu0 0.0
    %596 = vmatpush1.msra.mxu0 0.0
    %597 = vmatprep.subr.mxu0 0.0
    %598 = vmatpush1.msra.mxu0 0.0
    %599 = vmatprep.subr.mxu0 0.0
    %600 = vmatpush1.msra.mxu0 0.0
    %601 = vmatprep.subr.mxu0 0.0
    %602 = vmatpush1.msra.mxu0 0.0
    %603 = vmatprep.subr.mxu0 0.0
    %604 = vmatpush1.msra.mxu0 0.0
    %605 = vmatprep.subr.mxu0 0.0
    %606 = vmatpush1.msra.mxu0 0.0
    %607 = vmatprep.subr.mxu0 0.0
    %608 = vmatpush1.msra.mxu0 0.0
    %609 = vmatprep.subr.mxu0 0.0
    %610 = vmatpush1.msra.mxu0 0.0
    %611 = vmatprep.subr.mxu0 0.0
    %612 = vmatpush1.msra.mxu0 0.0
    %613 = vmatprep.subr.mxu0 0.0
    %614 = vmatpush1.msra.mxu0 0.0
    %615 = vmatprep.subr.mxu0 0.0
    %616 = vmatpush1.msra.mxu0 0.0
    %617 = vmatprep.subr.mxu0 0.0
    %618 = vmatpush1.msra.mxu0 0.0
    %619 = vmatprep.subr.mxu0 0.0
    %620 = vmatpush1.msra.mxu0 0.0
    %621 = vmatprep.subr.mxu0 0.0
    %622 = vmatpush1.msra.mxu0 0.0
    %623 = vmatprep.subr.mxu0 0.0
    %624 = vmatpush1.msra.mxu0 0.0
    %625 = vmatprep.subr.mxu0 0.0
    %626 = vmatpush1.msra.mxu0 0.0
    %627 = vmatprep.subr.mxu0 0.0
    %628 = vmatpush1.msra.mxu0 0.0
    %629 = vmatprep.subr.mxu0 0.0
    %630 = vmatpush1.msra.mxu0 0.0
    %631 = vmatprep.subr.mxu0 0.0
    %632 = vmatpush1.msra.mxu0 0.0
    %633 = vmatprep.subr.mxu0 0.0
    %634 = vmatpush1.msra.mxu0 0.0
    %635 = vmatprep.subr.mxu0 0.0
    %636 = vmatpush1.msra.mxu0 0.0
    %637 = vmatprep.subr.mxu0 0.0
    %638 = vmatpush1.msra.mxu0 0.0
    %639 = vmatprep.subr.mxu0 0.0
    %640 = vmatpush1.msra.mxu0 0.0
    %641 = vmatprep.subr.mxu0 0.0
    %642 = vmatpush1.msra.mxu0 0.0
    %643 = vmatprep.subr.mxu0 0.0
    %644 = vmatpush1.msra.mxu0 0.0
    %645 = vmatprep.subr.mxu0 0.0
    %646 = vmatpush1.msra.mxu0 0.0
    %647 = vmatprep.subr.mxu0 0.0
    %648 = vmatpush1.msra.mxu0 0.0
    %649 = vmatprep.subr.mxu0 0.0
    %650 = vmatpush1.msra.mxu0 0.0
    %651 = vmatprep.subr.mxu0 0.0
    %652 = vmatpush1.msra.mxu0 0.0
    %653 = vmatprep.mubr.f32.mxu0 0.0
    %654 = vmatmul.mubr.f32.gmra.mrb[0].mxu0 %v587
    %v655 = vpop.f32.mrb[0].mxu0
    %v656 = vadd.f32 0.0, %v655
    %v657 = vpop.f32.mrb[0].mxu0
    %658 = vdwg.mxu0
    %659 = vxpose.xlu0.b32.start [1/16] %v26, 128
    %660 = vxpose.xlu0.b32.cont [2/16] 0.0, 128
    %661 = vxpose.xlu0.b32.cont [3/16] 0.0, 128
    %662 = vxpose.xlu0.b32.cont [4/16] 0.0, 128
    %663 = vxpose.xlu0.b32.cont [5/16] 0.0, 128
    %664 = vxpose.xlu0.b32.cont [6/16] 0.0, 128
    %665 = vxpose.xlu0.b32.cont [7/16] 0.0, 128
    %666 = vxpose.xlu0.b32.cont [8/16] 0.0, 128
    %667 = vxpose.xlu0.b32.cont [9/16] 0.0, 128
    %668 = vxpose.xlu0.b32.cont [10/16] 0.0, 128
    %669 = vxpose.xlu0.b32.cont [11/16] 0.0, 128
    %670 = vxpose.xlu0.b32.cont [12/16] 0.0, 128
    %671 = vxpose.xlu0.b32.cont [13/16] 0.0, 128
    %672 = vxpose.xlu0.b32.cont [14/16] 0.0, 128
    %673 = vxpose.xlu0.b32.cont [15/16] 0.0, 128
    %674 = vxpose.xlu0.b32.end [16/16] 0.0, 128
    %v675 = vpop.trf.xlu0
    %v676 = vpop.trf.xlu0
    %v677 = vpop.trf.xlu0
    %v678 = vpop.trf.xlu0
    %v679 = vpop.trf.xlu0
    %v680 = vpop.trf.xlu0
    %v681 = vpop.trf.xlu0
    %v682 = vpop.trf.xlu0
    %v683 = vpop.trf.xlu0
    %v684 = vpop.trf.xlu0
    %v685 = vpop.trf.xlu0
    %v686 = vpop.trf.xlu0
    %v687 = vpop.trf.xlu0
    %v688 = vpop.trf.xlu0
    %v689 = vpop.trf.xlu0
    %v690 = vpop.trf.xlu0
    %v692 = vsel %vm60, %v675, 0
    %694 = vmatprep.subr.mxu0 0.0
    %695 = vmatpush1.msra.mxu0 %v18
    %696 = vmatprep.subr.mxu0 0.0
    %697 = vmatpush1.msra.mxu0 0.0
    %698 = vmatprep.subr.mxu0 0.0
    %699 = vmatpush1.msra.mxu0 0.0
    %700 = vmatprep.subr.mxu0 0.0
    %701 = vmatpush1.msra.mxu0 0.0
    %702 = vmatprep.subr.mxu0 0.0
    %703 = vmatpush1.msra.mxu0 0.0
    %704 = vmatprep.subr.mxu0 0.0
    %705 = vmatpush1.msra.mxu0 0.0
    %706 = vmatprep.subr.mxu0 0.0
    %707 = vmatpush1.msra.mxu0 0.0
    %708 = vmatprep.subr.mxu0 0.0
    %709 = vmatpush1.msra.mxu0 0.0
    %710 = vmatprep.subr.mxu0 0.0
    %711 = vmatpush1.msra.mxu0 0.0
    %712 = vmatprep.subr.mxu0 0.0
    %713 = vmatpush1.msra.mxu0 0.0
    %714 = vmatprep.subr.mxu0 0.0
    %715 = vmatpush1.msra.mxu0 0.0
    %716 = vmatprep.subr.mxu0 0.0
    %717 = vmatpush1.msra.mxu0 0.0
    %718 = vmatprep.subr.mxu0 0.0
    %719 = vmatpush1.msra.mxu0 0.0
    %720 = vmatprep.subr.mxu0 0.0
    %721 = vmatpush1.msra.mxu0 0.0
    %722 = vmatprep.subr.mxu0 0.0
    %723 = vmatpush1.msra.mxu0 0.0
    %724 = vmatprep.subr.mxu0 0.0
    %725 = vmatpush1.msra.mxu0 0.0
    %726 = vmatprep.subr.mxu0 0.0
    %727 = vmatpush1.msra.mxu0 0.0
    %728 = vmatprep.subr.mxu0 0.0
    %729 = vmatpush1.msra.mxu0 0.0
    %730 = vmatprep.subr.mxu0 0.0
    %731 = vmatpush1.msra.mxu0 0.0
    %732 = vmatprep.subr.mxu0 0.0
    %733 = vmatpush1.msra.mxu0 0.0
    %734 = vmatprep.subr.mxu0 0.0
    %735 = vmatpush1.msra.mxu0 0.0
    %736 = vmatprep.subr.mxu0 0.0
    %737 = vmatpush1.msra.mxu0 0.0
    %738 = vmatprep.subr.mxu0 0.0
    %739 = vmatpush1.msra.mxu0 0.0
    %740 = vmatprep.subr.mxu0 0.0
    %741 = vmatpush1.msra.mxu0 0.0
    %742 = vmatprep.subr.mxu0 0.0
    %743 = vmatpush1.msra.mxu0 0.0
    %744 = vmatprep.subr.mxu0 0.0
    %745 = vmatpush1.msra.mxu0 0.0
    %746 = vmatprep.subr.mxu0 0.0
    %747 = vmatpush1.msra.mxu0 0.0
    %748 = vmatprep.subr.mxu0 0.0
    %749 = vmatpush1.msra.mxu0 0.0
    %750 = vmatprep.subr.mxu0 0.0
    %751 = vmatpush1.msra.mxu0 0.0
    %752 = vmatprep.subr.mxu0 0.0
    %753 = vmatpush1.msra.mxu0 0.0
    %754 = vmatprep.subr.mxu0 0.0
    %755 = vmatpush1.msra.mxu0 0.0
    %756 = vmatprep.subr.mxu0 0.0
    %757 = vmatpush1.msra.mxu0 0.0
    %758 = vmatprep.mubr.f32.mxu0 0.0
    %759 = vmatmul.mubr.f32.gmra.mrb[0].mxu0 %v692
    %v760 = vpop.f32.mrb[0].mxu0
    %v761 = vadd.f32 0.0, %v760
    %v762 = vpop.f32.mrb[0].mxu0
    %763 = vdwg.mxu0
    %764 = vxpose.xlu0.b32.start [1/16] %v27, 128
    %765 = vxpose.xlu0.b32.cont [2/16] 0.0, 128
    %766 = vxpose.xlu0.b32.cont [3/16] 0.0, 128
    %767 = vxpose.xlu0.b32.cont [4/16] 0.0, 128
    %768 = vxpose.xlu0.b32.cont [5/16] 0.0, 128
    %769 = vxpose.xlu0.b32.cont [6/16] 0.0, 128
    %770 = vxpose.xlu0.b32.cont [7/16] 0.0, 128
    %771 = vxpose.xlu0.b32.cont [8/16] 0.0, 128
    %772 = vxpose.xlu0.b32.cont [9/16] 0.0, 128
    %773 = vxpose.xlu0.b32.cont [10/16] 0.0, 128
    %774 = vxpose.xlu0.b32.cont [11/16] 0.0, 128
    %775 = vxpose.xlu0.b32.cont [12/16] 0.0, 128
    %776 = vxpose.xlu0.b32.cont [13/16] 0.0, 128
    %777 = vxpose.xlu0.b32.cont [14/16] 0.0, 128
    %778 = vxpose.xlu0.b32.cont [15/16] 0.0, 128
    %779 = vxpose.xlu0.b32.end [16/16] 0.0, 128
    %v780 = vpop.trf.xlu0
    %v781 = vpop.trf.xlu0
    %v782 = vpop.trf.xlu0
    %v783 = vpop.trf.xlu0
    %v784 = vpop.trf.xlu0
    %v785 = vpop.trf.xlu0
    %v786 = vpop.trf.xlu0
    %v787 = vpop.trf.xlu0
    %v788 = vpop.trf.xlu0
    %v789 = vpop.trf.xlu0
    %v790 = vpop.trf.xlu0
    %v791 = vpop.trf.xlu0
    %v792 = vpop.trf.xlu0
    %v793 = vpop.trf.xlu0
    %v794 = vpop.trf.xlu0
    %v795 = vpop.trf.xlu0
    %v797 = vsel %vm60, %v780, 0
    %799 = vmatprep.subr.mxu0 0.0
    %800 = vmatpush1.msra.mxu0 %v19
    %801 = vmatprep.subr.mxu0 0.0
    %802 = vmatpush1.msra.mxu0 0.0
    %803 = vmatprep.subr.mxu0 0.0
    %804 = vmatpush1.msra.mxu0 0.0
    %805 = vmatprep.subr.mxu0 0.0
    %806 = vmatpush1.msra.mxu0 0.0
    %807 = vmatprep.subr.mxu0 0.0
    %808 = vmatpush1.msra.mxu0 0.0
    %809 = vmatprep.subr.mxu0 0.0
    %810 = vmatpush1.msra.mxu0 0.0
    %811 = vmatprep.subr.mxu0 0.0
    %812 = vmatpush1.msra.mxu0 0.0
    %813 = vmatprep.subr.mxu0 0.0
    %814 = vmatpush1.msra.mxu0 0.0
    %815 = vmatprep.subr.mxu0 0.0
    %816 = vmatpush1.msra.mxu0 0.0
    %817 = vmatprep.subr.mxu0 0.0
    %818 = vmatpush1.msra.mxu0 0.0
    %819 = vmatprep.subr.mxu0 0.0
    %820 = vmatpush1.msra.mxu0 0.0
    %821 = vmatprep.subr.mxu0 0.0
    %822 = vmatpush1.msra.mxu0 0.0
    %823 = vmatprep.subr.mxu0 0.0
    %824 = vmatpush1.msra.mxu0 0.0
    %825 = vmatprep.subr.mxu0 0.0
    %826 = vmatpush1.msra.mxu0 0.0
    %827 = vmatprep.subr.mxu0 0.0
    %828 = vmatpush1.msra.mxu0 0.0
    %829 = vmatprep.subr.mxu0 0.0
    %830 = vmatpush1.msra.mxu0 0.0
    %831 = vmatprep.subr.mxu0 0.0
    %832 = vmatpush1.msra.mxu0 0.0
    %833 = vmatprep.subr.mxu0 0.0
    %834 = vmatpush1.msra.mxu0 0.0
    %835 = vmatprep.subr.mxu0 0.0
    %836 = vmatpush1.msra.mxu0 0.0
    %837 = vmatprep.subr.mxu0 0.0
    %838 = vmatpush1.msra.mxu0 0.0
    %839 = vmatprep.subr.mxu0 0.0
    %840 = vmatpush1.msra.mxu0 0.0
    %841 = vmatprep.subr.mxu0 0.0
    %842 = vmatpush1.msra.mxu0 0.0
    %843 = vmatprep.subr.mxu0 0.0
    %844 = vmatpush1.msra.mxu0 0.0
    %845 = vmatprep.subr.mxu0 0.0
    %846 = vmatpush1.msra.mxu0 0.0
    %847 = vmatprep.subr.mxu0 0.0
    %848 = vmatpush1.msra.mxu0 0.0
    %849 = vmatprep.subr.mxu0 0.0
    %850 = vmatpush1.msra.mxu0 0.0
    %851 = vmatprep.subr.mxu0 0.0
    %852 = vmatpush1.msra.mxu0 0.0
    %853 = vmatprep.subr.mxu0 0.0
    %854 = vmatpush1.msra.mxu0 0.0
    %855 = vmatprep.subr.mxu0 0.0
    %856 = vmatpush1.msra.mxu0 0.0
    %857 = vmatprep.subr.mxu0 0.0
    %858 = vmatpush1.msra.mxu0 0.0
    %859 = vmatprep.subr.mxu0 0.0
    %860 = vmatpush1.msra.mxu0 0.0
    %861 = vmatprep.subr.mxu0 0.0
    %862 = vmatpush1.msra.mxu0 0.0
    %863 = vmatprep.mubr.f32.mxu0 0.0
    %864 = vmatmul.mubr.f32.gmra.mrb[0].mxu0 %v797
    %v865 = vpop.f32.mrb[0].mxu0
    %v866 = vadd.f32 0.0, %v865
    %v867 = vpop.f32.mrb[0].mxu0
    %868 = vdwg.mxu0
    %vm869 = vcmask 31744
    %v870 = vsel %vm869, %v20, 0.0
    %v871 = vrot.slane %v870, 4
    %v872 = vadd.f32 %v870, %v871
    %v873 = vrot.slane %v872, 2
    %v874 = vadd.f32 %v872, %v873
    %v875 = vrot.slane %v874, 1
    %v876 = vadd.f32 %v874, %v875
    %v877 = vsel %vm869, %v21, 0.0
    %v878 = vrot.slane %v877, 4
    %v879 = vadd.f32 %v877, %v878
    %v880 = vrot.slane %v879, 2
    %v881 = vadd.f32 %v879, %v880
    %v882 = vrot.slane %v881, 1
    %v883 = vadd.f32 %v881, %v882
    %v884 = vsel %vm869, %v22, 0.0
    %v885 = vrot.slane %v884, 4
    %v886 = vadd.f32 %v884, %v885
    %v887 = vrot.slane %v886, 2
    %v888 = vadd.f32 %v886, %v887
    %v889 = vrot.slane %v888, 1
    %v890 = vadd.f32 %v888, %v889
    %v891 = vsel %vm869, %v23, 0.0
    %v892 = vrot.slane %v891, 4
    %v893 = vadd.f32 %v891, %v892
    %v894 = vrot.slane %v893, 2
    %v895 = vadd.f32 %v893, %v894
    %v896 = vrot.slane %v895, 1
    %v897 = vadd.f32 %v895, %v896
    %v898 = vsel %vm869, %v24, 0.0
    %v899 = vrot.slane %v898, 4
    %v900 = vadd.f32 %v898, %v899
    %v901 = vrot.slane %v900, 2
    %v902 = vadd.f32 %v900, %v901
    %v903 = vrot.slane %v902, 1
    %v904 = vadd.f32 %v902, %v903
    %v905 = vsel %vm869, %v25, 0.0
    %v906 = vrot.slane %v905, 4
    %v907 = vadd.f32 %v905, %v906
    %v908 = vrot.slane %v907, 2
    %v909 = vadd.f32 %v907, %v908
    %v910 = vrot.slane %v909, 1
    %v911 = vadd.f32 %v909, %v910
    %v912 = vsel %vm869, %v26, 0.0
    %v913 = vrot.slane %v912, 4
    %v914 = vadd.f32 %v912, %v913
    %v915 = vrot.slane %v914, 2
    %v916 = vadd.f32 %v914, %v915
    %v917 = vrot.slane %v916, 1
    %v918 = vadd.f32 %v916, %v917
    %v919 = vsel %vm869, %v27, 0.0
    %v920 = vrot.slane %v919, 4
    %v921 = vadd.f32 %v919, %v920
    %v922 = vrot.slane %v921, 2
    %v923 = vadd.f32 %v921, %v922
    %v924 = vrot.slane %v923, 1
    %v925 = vadd.f32 %v923, %v924
    %927 = vbcast.lane.b32.xlu0 %v876, 256
    %v928 = vpop.permute.xlu0 %927
    %930 = vbcast.lane.b32.xlu0 %v883, 256
    %v931 = vpop.permute.xlu0 %930
    %933 = vbcast.lane.b32.xlu0 %v890, 256
    %v934 = vpop.permute.xlu0 %933
    %936 = vbcast.lane.b32.xlu0 %v897, 256
    %v937 = vpop.permute.xlu0 %936
    %939 = vbcast.lane.b32.xlu0 %v904, 256
    %v940 = vpop.permute.xlu0 %939
    %942 = vbcast.lane.b32.xlu0 %v911, 256
    %v943 = vpop.permute.xlu0 %942
    %945 = vbcast.lane.b32.xlu0 %v918, 256
    %v946 = vpop.permute.xlu0 %945
    %948 = vbcast.lane.b32.xlu0 %v925, 256
    %v949 = vpop.permute.xlu0 %948
    %v950 = vrcp.pop %v928
    %v951 = vmul.f32 %v131, %v950
    %v952 = vrcp.pop %v931
    %v953 = vmul.f32 %v236, %v952
    %v954 = vrcp.pop %v934
    %v955 = vmul.f32 %v341, %v954
    %v956 = vrcp.pop %v937
    %v957 = vmul.f32 %v446, %v956
    %v958 = vrcp.pop %v940
    %v959 = vmul.f32 %v551, %v958
    %v960 = vrcp.pop %v943
    %v961 = vmul.f32 %v656, %v960
    %v962 = vrcp.pop %v946
    %v963 = vmul.f32 %v761, %v962
    %v964 = vrcp.pop %v949
    %v965 = vmul.f32 %v866, %v964
    %vm966 = vcmask 257024
    %967 = vst.msk [vmem:[#allocation2] sm:$0xf] %vm966, %v951
    %968 = vst.msk [vmem:[#allocation2 + $0x4] sm:$0xf] %vm966, %v953
    %969 = vst.msk [vmem:[#allocation2 + $0x8] sm:$0xf] %vm966, %v955
    %970 = vst.msk [vmem:[#allocation2 + $0xc] sm:$0xf] %vm966, %v957
    %971 = vst.msk [vmem:[#allocation2 + $0x10] sm:$0xf] %vm966, %v959
    %972 = vst.msk [vmem:[#allocation2 + $0x14] sm:$0xf] %vm966, %v961
    %973 = vst.msk [vmem:[#allocation2 + $0x18] sm:$0xf] %vm966, %v963
    %974 = vst.msk [vmem:[#allocation2 + $0x1c] sm:$0xf] %vm966, %v965
    // Predicated region
    $region10: #{tpu_custom_call.1} parent=1 // pred_check
      _
    $region11: #{tpu_custom_call.1} parent=1 // pred_check_branch
      %976 = sbr.rel (0) target = $region13
    $region12: #{tpu_custom_call.1} parent=1 // pred_region
      %s978 = ssub.s32 512, 512
      %979 = vsyncadd [#allocation3], %s978
      %s980 = sshll.u32 [#allocation2], 4
      %s981 = int_to_ptr.vmem [resolvable:$true] %s980
      %986 = dma.vmem_to_hbm [thread:$0]  %s981, 512, %s2, [#allocation3], 64, 64, 4
    $region13: #{tpu_custom_call.1} parent=1 // pred_fallthru
      _
    // Predicated region
    $region14: #{tpu_custom_call.1} parent=1 // pred_check
      _
    $region15: #{tpu_custom_call.1} parent=1 // pred_check_branch
      %988 = sbr.rel (0) target = $region17
    $region16: #{tpu_custom_call.1} parent=1 // pred_region
      %989 = dma.done [#allocation3], 512
    $region17: #{tpu_custom_call.1} parent=1 // pred_fallthru
      _
    %990 = vsyncpa [#allocation3], 1

</llo_original>
